<compile_context>
chip_gen: v7x
topology: tpu7x:2x2x1
jax: 0.10.0
libtpu: 0.0.40
codegen_flags: <defaults>
</compile_context>

<pallas_src>
from math import pi, factorial

import numpy as np
import jax
import jax.numpy as jnp
from jax.experimental import pallas as pl
from jax.experimental.pallas import tpu as pltpu


# ----------------------------------------------------------------------------
# Filter construction (deterministic, mirrors the torch __init__ exactly).
# All steerable-pyramid filters are purely real (torch casts them to complex64),
# so the complex multiply reduces to a real elementwise multiply on interleaved
# (re, im) data with the filter repeated 2x along the last axis.
# ----------------------------------------------------------------------------
def _high_filter(r):
    band = (r > pi / 4) & (r < pi / 2)
    return (r >= pi / 2).astype(np.float64) + band * np.cos(
        pi / 2 * (np.log(2.0 * r / pi) / np.log(2.0)))


def _low_filter(r):
    band = (r > pi / 4) & (r < pi / 2)
    return (r <= pi / 4).astype(np.float64) + band * np.cos(
        pi / 2 * (np.log(4.0 * r / pi) / np.log(2.0)))


def _steer_filter(t, k, n):
    alpha = 2 ** (n - 1) * factorial(n - 1) / (n * factorial(2 * (n - 1))) ** 0.5
    mask = np.abs(np.remainder(t + pi - pi * k / n, 2.0 * pi) - pi) < pi / 2
    return alpha * np.cos(t - pi * k / n) ** (n - 1) * mask


# ----------------------------------------------------------------------------
# Pallas kernel: all-bands (real-filter x interleaved-complex) multiply on a
# (tile_n, tile_h, W2) tile.  Static unroll over the small band count; each
# store targets a dense (tile_h, W2) slab (dense sublanes/lanes, no band-dim
# padding in the vreg-tiled dims).
# ----------------------------------------------------------------------------
def _band_mul_kernel(filt_ref, x_ref, o_ref):
    # filt_ref: (n_bands, tile_h, W2)  real filter, re/im-duplicated along W2
    # x_ref:    (tile_n,  tile_h, W2)  interleaved (re, im) spectrum tile
    # o_ref:    (tile_n, n_bands, tile_h, W2)
    x = x_ref[...]
    for b in range(o_ref.shape[1]):          # small static unroll (<= 6 bands)
        o_ref[:, b, :, :] = x * filt_ref[b, :, :]


# ----------------------------------------------------------------------------
# Tiling / VMEM helpers.
# ----------------------------------------------------------------------------
def _vmem_caps():
    """(physical VMEM per core, working-set budget for this kernel)."""
    cap = 64 << 20                     # conservative default if query fails
    try:
        cap = int(pltpu.get_tpu_info().vmem_capacity_bytes)
    except Exception:
        pass
    budget = (48 << 20) if cap <= (64 << 20) else (96 << 20)   # v7x vs v5e/v6e
    return cap, budget


def _h_tile_candidates(H):
    # second-to-last vreg dim: must be a multiple of 8 OR the full extent.
    cands = [t for t in range(8, H + 1, 8) if H % t == 0]
    if not cands:
        cands = [H]
    return sorted(set(cands), reverse=True)


def _n_tile_candidates(N, cap=128):
    # leading block dim: any divisor of N is legal.
    return sorted({d for d in range(1, min(N, cap) + 1) if N % d == 0},
                  reverse=True)


def apply_bands(filt3, x3):
    """filt3: (n_bands, H, W2) f32  (real filter, repeated 2x along last axis)
       x3:    (N, H, W2)       f32  (interleaved re/im spectrum)
       ->     (N, n_bands, H, W2) f32 (interleaved re/im, every band)."""
    n_bands, H, W2 = filt3.shape
    N = x3.shape[0]
    cap, budget = _vmem_caps()

    def blk_bytes(tn, th):             # double-buffered working set per grid step
        return 2 * 4 * th * W2 * (n_bands + tn + tn * n_bands)

    h_cands = _h_tile_candidates(H)
    n_cands = _n_tile_candidates(N)
    tile_h, tile_n, best = h_cands[-1], 1, -1
    for th in h_cands:
        for tn in n_cands:
            if blk_bytes(tn, th) <= budget and tn * th > best:
                best, tile_h, tile_n = tn * th, th, tn

    est = blk_bytes(tile_n, tile_h)
    vmem_limit = int(max(budget, min(est + (8 << 20), max(cap - (8 << 20), budget))))

    # N innermost so the filter's block index is constant across it -> no refetch.
    grid = (H // tile_h, N // tile_n)

    grid_spec = pltpu.PrefetchScalarGridSpec(
        num_scalar_prefetch=0,
        grid=grid,
        in_specs=[
            pl.BlockSpec((n_bands, tile_h, W2), lambda j, i: (0, j, 0)),
            pl.BlockSpec((tile_n, tile_h, W2), lambda j, i: (i, j, 0)),
        ],
        out_specs=pl.BlockSpec((tile_n, n_bands, tile_h, W2),
                               lambda j, i: (i, 0, j, 0)),
    )
    cost = pl.CostEstimate(
        flops=N * n_bands * H * W2,
        transcendentals=0,
        bytes_accessed=4 * (N * H * W2 + n_bands * H * W2 + N * n_bands * H * W2),
    )
    return pl.pallas_call(
        _band_mul_kernel,
        out_shape=jax.ShapeDtypeStruct((N, n_bands, H, W2), jnp.float32),
        grid_spec=grid_spec,
        compiler_params=pltpu.CompilerParams(
            dimension_semantics=("parallel", "parallel"),
            vmem_limit_bytes=vmem_limit,
        ),
        cost_estimate=cost,
    )(filt3, x3)


# ----------------------------------------------------------------------------
# complex64 <-> interleaved-f32 glue (wrapper side, outside the kernel).
# ----------------------------------------------------------------------------
_COMPLEX_BITCAST = None


def _complex_bitcast_supported():
    """True iff f32[...,2] <-> complex64 bitcasts round-trip exactly here."""
    global _COMPLEX_BITCAST
    if _COMPLEX_BITCAST is None:
        try:
            z = jnp.arange(8, dtype=jnp.float32).reshape(2, 2, 2)
            c = jax.lax.bitcast_convert_type(z, jnp.complex64)
            back = jax.lax.bitcast_convert_type(c, jnp.float32)
            _COMPLEX_BITCAST = (
                c.shape == (2, 2)
                and bool(jnp.array_equal(back, z))
                and bool(jnp.array_equal(jnp.real(c), z[..., 0]))
                and bool(jnp.array_equal(jnp.imag(c), z[..., 1]))
            )
        except Exception:
            _COMPLEX_BITCAST = False
    return _COMPLEX_BITCAST


def _c64_to_interleaved(x):
    """(..., W) complex64 -> (..., 2W) float32, [re0, im0, re1, im1, ...]."""
    if _complex_bitcast_supported():
        y = jax.lax.bitcast_convert_type(x, jnp.float32)       # (..., W, 2), free-ish
    else:
        y = jnp.stack([jnp.real(x), jnp.imag(x)], axis=-1)     # fallback: extra pass
    return y.reshape(x.shape[:-1] + (2 * x.shape[-1],))


def _interleaved_to_c64(y):
    """(..., 2W) float32 -> (..., W) complex64."""
    y2 = y.reshape(y.shape[:-1] + (y.shape[-1] // 2, 2))
    if _complex_bitcast_supported():
        return jax.lax.bitcast_convert_type(y2, jnp.complex64)
    return jax.lax.complex(y2[..., 0], y2[..., 1])             # fallback: extra pass


# ----------------------------------------------------------------------------
# Module-equivalent wrapper.
# ----------------------------------------------------------------------------
class LayerSteerablePyramidPallas:
    def __init__(self, n_i=256, n_j=256, scale=0, n_ori=4, is_first=False,
                 real=False, up_sampled=False, fourier=False, double_phase=False):
        if real and fourier:
            raise ValueError("real and fourier cannot be simultaneously true")
        self.n_ori = n_ori
        self.n_i, self.n_j = n_i, n_j
        self.scale = scale
        self.n_i_ = n_i // 2 ** scale
        self.n_j_ = n_j // 2 ** scale
        self.is_first = is_first
        self.real = real
        self.up_sampled = up_sampled
        self.fourier = fourier
        self.double_phase = double_phase
        self.n_bands = n_ori + 1 + (1 if is_first else 0)

        l_y = np.linspace(-self.n_i_ // 2, self.n_i_ // 2 - 1, self.n_i_)
        l_x = np.linspace(-self.n_j_ // 2, self.n_j_ // 2 - 1, self.n_j_)
        x, y = np.meshgrid(l_x, l_y)                       # indexing='xy', like torch
        r = np.sqrt((x * 2 * pi / self.n_j_) ** 2 + (y * 2 * pi / self.n_i_) ** 2)
        th = np.arctan2(y, x)
        r[self.n_i_ // 2, self.n_j_ // 2] = 1e-15

        filter_l = _low_filter(r)
        filter_h = _high_filter(r)
        filter_ori = [_steer_filter(th, k, n_ori) for k in range(n_ori)]

        bands = []
        if is_first:
            filter_l0 = _low_filter(r / 2)
            filter_h0 = _high_filter(r / 2)
            bands.append(filter_h0)                        # band 0: H0 * input
            pre = filter_l0                                # low = L0 * input
        else:
            pre = np.ones_like(r)                          # low = input
        for k in range(n_ori):
            bands.append(2.0 * filter_ori[k] * filter_h * pre)
        bands.append(filter_l * pre)                       # last band: lowpass residual

        bands_np = np.stack(bands).astype(np.float32)      # (n_bands, H, W), shifted domain
        self.filt = jnp.asarray(bands_np)
        # interleaved (repeat 2x on last axis) filters for the Pallas kernel;
        # ifftshift baked in for the spatial-output fast path.
        self.filt_il = jnp.asarray(np.repeat(bands_np, 2, axis=-1))
        self.filt_il_ishift = jnp.asarray(
            np.repeat(np.fft.ifftshift(bands_np, axes=(-2, -1)), 2, axis=-1))
        self.low = None
        self.output = None

    def __call__(self, inp):
        # inp: (B, C, H, W) complex (shifted Fourier-domain input, as in torch).
        inp = jnp.asarray(inp).astype(jnp.complex64)
        B, C = inp.shape[0], inp.shape[1]
        H, W = self.n_i_, self.n_j_
        N = B * C
        nb = self.n_bands

        # Fast path: bake ifftshift into the filters + a single input shift, so the
        # banded output never needs a separate ifftshift pass.
        fast_shift = (not self.fourier) and not (self.up_sampled and not self.is_first)

        if fast_shift:
            x_c = jnp.fft.ifftshift(inp, axes=(-2, -1))    # cheap: 1x input size
            filt3 = self.filt_il_ishift
        else:
            x_c = inp
            filt3 = self.filt_il

        x3 = _c64_to_interleaved(x_c).reshape(N, H, 2 * W)
        o4 = apply_bands(filt3, x3)                        # (N, nb, H, 2W) f32
        out = _interleaved_to_c64(o4).reshape(B, C, nb, H, W)

        if fast_shift:
            # kernel last band == ifftshift(self.low)  ->  recover self.low for free-ish
            self.low = jnp.fft.fftshift(out[:, :, -1], axes=(-2, -1))
            # TODO(synk): FFT has no Pallas TPU equivalent; XLA FFT (shift already applied).
            out = jnp.fft.ifft2(out)
        else:
            self.low = out[:, :, -1]
            if self.up_sampled and not self.is_first:
                pad_i = (self.n_i - self.n_i_) // 2
                pad_j = (self.n_j - self.n_j_) // 2
                out = jnp.pad(out, ((0, 0), (0, 0), (0, 0),
                                    (pad_i, pad_i), (pad_j, pad_j)))
            if not self.fourier:
                out = jnp.fft.ifft2(jnp.fft.ifftshift(out, axes=(-2, -1)))
                if self.double_phase and self.up_sampled and not self.is_first:
                    rmag = jnp.abs(out)
                    theta = jnp.angle(out)
                    out = (rmag * jnp.exp(1j * (2 ** self.scale) * theta)
                           ).astype(jnp.complex64)

        if self.real:
            out = jnp.real(out)
        self.output = out
        return out


if __name__ == "__main__":
    key = jax.random.PRNGKey(0)
    B, C, H, W = 2, 4, 16, 16
    k1, k2 = jax.random.split(key)
    x = (jax.random.normal(k1, (B, C, H, W), dtype=jnp.float32)
         + 1j * jax.random.normal(k2, (B, C, H, W), dtype=jnp.float32)
         ).astype(jnp.complex64)

    # Spatial-domain path (ifftshift folded into filters).
    layer = LayerSteerablePyramidPallas(n_i=H, n_j=W, scale=0, n_ori=4, is_first=True,
                                        real=False, up_sampled=False, fourier=False)
    out = jax.block_until_ready(layer(x))
    assert out.shape == (B, C, layer.n_bands, H, W)
    assert out.dtype == jnp.complex64

    # Pure-JAX reference of the torch forward (no Pallas).
    ref = layer.filt[None, None].astype(jnp.complex64) * x[:, :, None]
    ref_low = ref[:, :, -1]
    ref = jnp.fft.ifft2(jnp.fft.ifftshift(ref, axes=(-2, -1)))
    assert jnp.allclose(out, ref, atol=1e-5), "mismatch vs pure-JAX reference (spatial path)"
    assert jnp.allclose(layer.low, ref_low, atol=1e-5), "mismatch vs reference (self.low)"

    # Fourier-domain path (exercises the non-baked branch of the kernel).
    layer_f = LayerSteerablePyramidPallas(n_i=H, n_j=W, scale=0, n_ori=4, is_first=True,
                                          real=False, up_sampled=False, fourier=True)
    out_f = jax.block_until_ready(layer_f(x))
    ref_f = layer_f.filt[None, None].astype(jnp.complex64) * x[:, :, None]
    assert jnp.allclose(out_f, ref_f, atol=1e-5), "mismatch vs pure-JAX reference (fourier path)"

    print("KERNEL_OK")
</pallas_src>

<mosaic_0001>
module attributes {stable_mosaic.version = 11 : i64} {
  func.func @_band_mul_kernel(%arg0: i32, %arg1: i32, %arg2: memref<6x16x32xf32, #tpu.memory_space<vmem>>, %arg3: memref<8x16x32xf32, #tpu.memory_space<vmem>>, %arg4: memref<8x6x16x32xf32, #tpu.memory_space<vmem>>) attributes {dimension_semantics = [#tpu.dimension_semantics<parallel>, #tpu.dimension_semantics<parallel>], iteration_bounds = array<i64: 1, 1>, scalar_prefetch = 0 : i64, scratch_operands = 0 : i64, tpu.core_type = #tpu.core_type<tc>, window_params = [{transform_indices = @transform_0, window_bounds = array<i64: 6, 16, 32>}, {transform_indices = @transform_1, window_bounds = array<i64: 8, 16, 32>}, {transform_indices = @transform_2, window_bounds = array<i64: 8, 6, 16, 32>}]} {
    %c0 = arith.constant 0 : index
    %c0_0 = arith.constant 0 : index
    %c0_1 = arith.constant 0 : index
    %0 = vector.load %arg3[%c0, %c0_0, %c0_1] : memref<8x16x32xf32, #tpu.memory_space<vmem>>, vector<8x16x32xf32>
    %c0_2 = arith.constant 0 : index
    %c0_3 = arith.constant 0 : index
    %c0_4 = arith.constant 0 : index
    %1 = vector.load %arg2[%c0_2, %c0_3, %c0_4] : memref<6x16x32xf32, #tpu.memory_space<vmem>>, vector<1x16x32xf32>
    %2 = vector.shape_cast %1 : vector<1x16x32xf32> to vector<16x32xf32>
    %3 = vector.shape_cast %2 : vector<16x32xf32> to vector<1x16x32xf32>
    %4 = vector.broadcast %3 : vector<1x16x32xf32> to vector<8x16x32xf32>
    %5 = arith.mulf %0, %4 : vector<8x16x32xf32>
    %c0_5 = arith.constant 0 : index
    %c0_6 = arith.constant 0 : index
    %c0_7 = arith.constant 0 : index
    %c0_8 = arith.constant 0 : index
    %6 = vector.load %arg4[%c0_5, %c0_6, %c0_7, %c0_8] : memref<8x6x16x32xf32, #tpu.memory_space<vmem>>, vector<8x1x16x32xf32>
    %7 = vector.shape_cast %6 : vector<8x1x16x32xf32> to vector<8x16x32xf32>
    %8 = vector.shape_cast %5 : vector<8x16x32xf32> to vector<8x1x16x32xf32>
    tpu.vector_store %arg4[%c0_5, %c0_6, %c0_7, %c0_8], %8 {strides = array<i32>} : memref<8x6x16x32xf32, #tpu.memory_space<vmem>>, vector<8x1x16x32xf32>,
    %c1 = arith.constant 1 : index
    %c0_9 = arith.constant 0 : index
    %c0_10 = arith.constant 0 : index
    %9 = vector.load %arg2[%c1, %c0_9, %c0_10] : memref<6x16x32xf32, #tpu.memory_space<vmem>>, vector<1x16x32xf32>
    %10 = vector.shape_cast %9 : vector<1x16x32xf32> to vector<16x32xf32>
    %11 = vector.shape_cast %10 : vector<16x32xf32> to vector<1x16x32xf32>
    %12 = vector.broadcast %11 : vector<1x16x32xf32> to vector<8x16x32xf32>
    %13 = arith.mulf %0, %12 : vector<8x16x32xf32>
    %c0_11 = arith.constant 0 : index
    %c1_12 = arith.constant 1 : index
    %c0_13 = arith.constant 0 : index
    %c0_14 = arith.constant 0 : index
    %14 = vector.load %arg4[%c0_11, %c1_12, %c0_13, %c0_14] : memref<8x6x16x32xf32, #tpu.memory_space<vmem>>, vector<8x1x16x32xf32>
    %15 = vector.shape_cast %14 : vector<8x1x16x32xf32> to vector<8x16x32xf32>
    %16 = vector.shape_cast %13 : vector<8x16x32xf32> to vector<8x1x16x32xf32>
    tpu.vector_store %arg4[%c0_11, %c1_12, %c0_13, %c0_14], %16 {strides = array<i32>} : memref<8x6x16x32xf32, #tpu.memory_space<vmem>>, vector<8x1x16x32xf32>,
    %c2 = arith.constant 2 : index
    %c0_15 = arith.constant 0 : index
    %c0_16 = arith.constant 0 : index
    %17 = vector.load %arg2[%c2, %c0_15, %c0_16] : memref<6x16x32xf32, #tpu.memory_space<vmem>>, vector<1x16x32xf32>
    %18 = vector.shape_cast %17 : vector<1x16x32xf32> to vector<16x32xf32>
    %19 = vector.shape_cast %18 : vector<16x32xf32> to vector<1x16x32xf32>
    %20 = vector.broadcast %19 : vector<1x16x32xf32> to vector<8x16x32xf32>
    %21 = arith.mulf %0, %20 : vector<8x16x32xf32>
    %c0_17 = arith.constant 0 : index
    %c2_18 = arith.constant 2 : index
    %c0_19 = arith.constant 0 : index
    %c0_20 = arith.constant 0 : index
    %22 = vector.load %arg4[%c0_17, %c2_18, %c0_19, %c0_20] : memref<8x6x16x32xf32, #tpu.memory_space<vmem>>, vector<8x1x16x32xf32>
    %23 = vector.shape_cast %22 : vector<8x1x16x32xf32> to vector<8x16x32xf32>
    %24 = vector.shape_cast %21 : vector<8x16x32xf32> to vector<8x1x16x32xf32>
    tpu.vector_store %arg4[%c0_17, %c2_18, %c0_19, %c0_20], %24 {strides = array<i32>} : memref<8x6x16x32xf32, #tpu.memory_space<vmem>>, vector<8x1x16x32xf32>,
    %c3 = arith.constant 3 : index
    %c0_21 = arith.constant 0 : index
    %c0_22 = arith.constant 0 : index
    %25 = vector.load %arg2[%c3, %c0_21, %c0_22] : memref<6x16x32xf32, #tpu.memory_space<vmem>>, vector<1x16x32xf32>
    %26 = vector.shape_cast %25 : vector<1x16x32xf32> to vector<16x32xf32>
    %27 = vector.shape_cast %26 : vector<16x32xf32> to vector<1x16x32xf32>
    %28 = vector.broadcast %27 : vector<1x16x32xf32> to vector<8x16x32xf32>
    %29 = arith.mulf %0, %28 : vector<8x16x32xf32>
    %c0_23 = arith.constant 0 : index
    %c3_24 = arith.constant 3 : index
    %c0_25 = arith.constant 0 : index
    %c0_26 = arith.constant 0 : index
    %30 = vector.load %arg4[%c0_23, %c3_24, %c0_25, %c0_26] : memref<8x6x16x32xf32, #tpu.memory_space<vmem>>, vector<8x1x16x32xf32>
    %31 = vector.shape_cast %30 : vector<8x1x16x32xf32> to vector<8x16x32xf32>
    %32 = vector.shape_cast %29 : vector<8x16x32xf32> to vector<8x1x16x32xf32>
    tpu.vector_store %arg4[%c0_23, %c3_24, %c0_25, %c0_26], %32 {strides = array<i32>} : memref<8x6x16x32xf32, #tpu.memory_space<vmem>>, vector<8x1x16x32xf32>,
    %c4 = arith.constant 4 : index
    %c0_27 = arith.constant 0 : index
    %c0_28 = arith.constant 0 : index
    %33 = vector.load %arg2[%c4, %c0_27, %c0_28] : memref<6x16x32xf32, #tpu.memory_space<vmem>>, vector<1x16x32xf32>
    %34 = vector.shape_cast %33 : vector<1x16x32xf32> to vector<16x32xf32>
    %35 = vector.shape_cast %34 : vector<16x32xf32> to vector<1x16x32xf32>
    %36 = vector.broadcast %35 : vector<1x16x32xf32> to vector<8x16x32xf32>
    %37 = arith.mulf %0, %36 : vector<8x16x32xf32>
    %c0_29 = arith.constant 0 : index
    %c4_30 = arith.constant 4 : index
    %c0_31 = arith.constant 0 : index
    %c0_32 = arith.constant 0 : index
    %38 = vector.load %arg4[%c0_29, %c4_30, %c0_31, %c0_32] : memref<8x6x16x32xf32, #tpu.memory_space<vmem>>, vector<8x1x16x32xf32>
    %39 = vector.shape_cast %38 : vector<8x1x16x32xf32> to vector<8x16x32xf32>
    %40 = vector.shape_cast %37 : vector<8x16x32xf32> to vector<8x1x16x32xf32>
    tpu.vector_store %arg4[%c0_29, %c4_30, %c0_31, %c0_32], %40 {strides = array<i32>} : memref<8x6x16x32xf32, #tpu.memory_space<vmem>>, vector<8x1x16x32xf32>,
    %c5 = arith.constant 5 : index
    %c0_33 = arith.constant 0 : index
    %c0_34 = arith.constant 0 : index
    %41 = vector.load %arg2[%c5, %c0_33, %c0_34] : memref<6x16x32xf32, #tpu.memory_space<vmem>>, vector<1x16x32xf32>
    %42 = vector.shape_cast %41 : vector<1x16x32xf32> to vector<16x32xf32>
    %43 = vector.shape_cast %42 : vector<16x32xf32> to vector<1x16x32xf32>
    %44 = vector.broadcast %43 : vector<1x16x32xf32> to vector<8x16x32xf32>
    %45 = arith.mulf %0, %44 : vector<8x16x32xf32>
    %c0_35 = arith.constant 0 : index
    %c5_36 = arith.constant 5 : index
    %c0_37 = arith.constant 0 : index
    %c0_38 = arith.constant 0 : index
    %46 = vector.load %arg4[%c0_35, %c5_36, %c0_37, %c0_38] : memref<8x6x16x32xf32, #tpu.memory_space<vmem>>, vector<8x1x16x32xf32>
    %47 = vector.shape_cast %46 : vector<8x1x16x32xf32> to vector<8x16x32xf32>
    %48 = vector.shape_cast %45 : vector<8x16x32xf32> to vector<8x1x16x32xf32>
    tpu.vector_store %arg4[%c0_35, %c5_36, %c0_37, %c0_38], %48 {strides = array<i32>} : memref<8x6x16x32xf32, #tpu.memory_space<vmem>>, vector<8x1x16x32xf32>,
    return
  }
  func.func @transform_0(%arg0: i32, %arg1: i32) -> (i32, i32, i32) {
    %c0_i32 = arith.constant 0 : i32
    %c0_i32_0 = arith.constant 0 : i32
    %c0_i32_1 = arith.constant 0 : i32
    return %c0_i32, %arg0, %c0_i32_0 : i32, i32, i32
  }
  func.func @transform_1(%arg0: i32, %arg1: i32) -> (i32, i32, i32) {
    %c0_i32 = arith.constant 0 : i32
    %c0_i32_0 = arith.constant 0 : i32
    return %arg1, %arg0, %c0_i32 : i32, i32, i32
  }
  func.func @transform_2(%arg0: i32, %arg1: i32) -> (i32, i32, i32, i32) {
    %c0_i32 = arith.constant 0 : i32
    %c0_i32_0 = arith.constant 0 : i32
    %c0_i32_1 = arith.constant 0 : i32
    return %arg1, %c0_i32, %arg0, %c0_i32_0 : i32, i32, i32, i32
  }
}

</mosaic_0001>

<llo_original>
// kernel: tpu_custom_call.1
$region0: #{tpu_custom_call.1}
  #allocation0 [shape = 'u32[]', space=smem, size = 0x4, offset = 0x4, fixed_abs, tag = 'smem constant byte address 0x4 - core index']
  #allocation1 [shape = 'u32[144,128]{1,0:T(1,128)}', space=vmem, size = 0x12000, scoped, tag = 'internal scratch']
  %s0 = inlined_call_operand.hbm [shape: f32[6,16,32], index: 0, kind: input, shape index: {}]
  %s1 = inlined_call_operand.hbm [shape: f32[8,16,32], index: 1, kind: input, shape index: {}]
  %s2 = inlined_call_operand.hbm [shape: f32[8,6,16,32], index: 2, kind: output, shape index: {}]
  %s3 = sld [smem:[#allocation0]]
  $region26: #{tpu_custom_call.1} parent=0
    _
  %s5 = ssub.s32 1, %s3
  %s6 = scalar_select 0, %s5, %s3
  $region1: #{tpu_custom_call.1} parent=0
    #allocation2 [shape = 'u8[49152]{0}', space=vmem, size = 0xc000, scoped, tag = 'input window, operand 0, single buffered']
    #allocation3 [shape = 's32[1]{0}', space=sflag, size = 0x4, scoped, tag = 'scoped memory for tpu_custom_call.1']
    #allocation4 [shape = 's32[1]{0}', space=sflag, size = 0x4, scoped, tag = 'scoped memory for tpu_custom_call.1']
    #allocation5 [shape = 'u8[65536]{0}', space=vmem, size = 0x10000, scoped, tag = 'input window, operand 1, single buffered']
    #allocation6 [shape = 's32[1]{0}', space=sflag, size = 0x4, scoped, tag = 'scoped memory for tpu_custom_call.1']
    #allocation7 [shape = 'u8[393216]{0}', space=vmem, size = 0x60000, scoped, tag = 'output window, operand 0, single buffered']
    %7 = vsyncpa [#allocation3], 0
    %8 = vsyncpa [#allocation6], 0
    %9 = vsyncpa [#allocation4], 0
    // Predicated region
    $region2: #{tpu_custom_call.1} parent=1 // pred_check
      _
    $region3: #{tpu_custom_call.1} parent=1 // pred_check_branch
      %11 = sbr.rel (0) target = $region5
    $region4: #{tpu_custom_call.1} parent=1 // pred_region
      %s13 = ssub.s32 1536, 1536
      %14 = vsyncadd [#allocation3], %s13
      %s15 = sshll.u32 [#allocation2], 4
      %s16 = int_to_ptr.vmem [resolvable:$true] %s15
      %21 = dma.hbm_to_vmem [thread:$0]  %s0, 1536, %s16, [#allocation3], 128, 128, 8
    $region5: #{tpu_custom_call.1} parent=1 // pred_fallthru
      _
    // Predicated region
    $region6: #{tpu_custom_call.1} parent=1 // pred_check
      _
    $region7: #{tpu_custom_call.1} parent=1 // pred_check_branch
      %23 = sbr.rel (0) target = $region9
    $region8: #{tpu_custom_call.1} parent=1 // pred_region
      %s25 = ssub.s32 2048, 2048
      %26 = vsyncadd [#allocation6], %s25
      %s27 = sshll.u32 [#allocation5], 4
      %s28 = int_to_ptr.vmem [resolvable:$true] %s27
      %33 = dma.hbm_to_vmem [thread:$0]  %s1, 2048, %s28, [#allocation6], 128, 128, 8
    $region9: #{tpu_custom_call.1} parent=1 // pred_fallthru
      _
    // Predicated region
    $region10: #{tpu_custom_call.1} parent=1 // pred_check
      _
    $region11: #{tpu_custom_call.1} parent=1 // pred_check_branch
      %35 = sbr.rel (0) target = $region13
    $region12: #{tpu_custom_call.1} parent=1 // pred_region
      %36 = dma.done [#allocation3], 1536
    $region13: #{tpu_custom_call.1} parent=1 // pred_fallthru
      _
    // Predicated region
    $region14: #{tpu_custom_call.1} parent=1 // pred_check
      _
    $region15: #{tpu_custom_call.1} parent=1 // pred_check_branch
      %38 = sbr.rel (0) target = $region17
    $region16: #{tpu_custom_call.1} parent=1 // pred_region
      %39 = dma.done [#allocation6], 2048
    $region17: #{tpu_custom_call.1} parent=1 // pred_fallthru
      _
    %v40 = vld [vmem:[#allocation5] sm:$0xff]
    %v41 = vld [vmem:[#allocation5 + $0x8] sm:$0xff]
    %v42 = vld [vmem:[#allocation5 + $0x10] sm:$0xff]
    %v43 = vld [vmem:[#allocation5 + $0x18] sm:$0xff]
    %v44 = vld [vmem:[#allocation5 + $0x20] sm:$0xff]
    %v45 = vld [vmem:[#allocation5 + $0x28] sm:$0xff]
    %v46 = vld [vmem:[#allocation5 + $0x30] sm:$0xff]
    %v47 = vld [vmem:[#allocation5 + $0x38] sm:$0xff]
    %v48 = vld [vmem:[#allocation5 + $0x40] sm:$0xff]
    %v49 = vld [vmem:[#allocation5 + $0x48] sm:$0xff]
    %v50 = vld [vmem:[#allocation5 + $0x50] sm:$0xff]
    %v51 = vld [vmem:[#allocation5 + $0x58] sm:$0xff]
    %v52 = vld [vmem:[#allocation5 + $0x60] sm:$0xff]
    %v53 = vld [vmem:[#allocation5 + $0x68] sm:$0xff]
    %v54 = vld [vmem:[#allocation5 + $0x70] sm:$0xff]
    %v55 = vld [vmem:[#allocation5 + $0x78] sm:$0xff]
    %v56 = vld [vmem:[#allocation2] sm:$0xff]
    %v57 = vld [vmem:[#allocation2 + $0x8] sm:$0xff]
    %v58 = vmul.f32 %v40, %v56
    %v59 = vmul.f32 %v41, %v57
    %v60 = vmul.f32 %v42, %v56
    %v61 = vmul.f32 %v43, %v57
    %v62 = vmul.f32 %v44, %v56
    %v63 = vmul.f32 %v45, %v57
    %v64 = vmul.f32 %v46, %v56
    %v65 = vmul.f32 %v47, %v57
    %v66 = vmul.f32 %v48, %v56
    %v67 = vmul.f32 %v49, %v57
    %v68 = vmul.f32 %v50, %v56
    %v69 = vmul.f32 %v51, %v57
    %v70 = vmul.f32 %v52, %v56
    %v71 = vmul.f32 %v53, %v57
    %v72 = vmul.f32 %v54, %v56
    %v73 = vmul.f32 %v55, %v57
    %vm74 = vcmask 261120
    %75 = vst.msk [vmem:[#allocation7] sm:$0xff] %vm74, %v58
    %76 = vst.msk [vmem:[#allocation7 + $0x8] sm:$0xff] %vm74, %v59
    %77 = vst.msk [vmem:[#allocation7 + $0x60] sm:$0xff] %vm74, %v60
    %78 = vst.msk [vmem:[#allocation7 + $0x68] sm:$0xff] %vm74, %v61
    %79 = vst.msk [vmem:[#allocation7 + $0xc0] sm:$0xff] %vm74, %v62
    %80 = vst.msk [vmem:[#allocation7 + $0xc8] sm:$0xff] %vm74, %v63
    %81 = vst.msk [vmem:[#allocation7 + $0x120] sm:$0xff] %vm74, %v64
    %82 = vst.msk [vmem:[#allocation7 + $0x128] sm:$0xff] %vm74, %v65
    %83 = vst.msk [vmem:[#allocation7 + $0x180] sm:$0xff] %vm74, %v66
    %84 = vst.msk [vmem:[#allocation7 + $0x188] sm:$0xff] %vm74, %v67
    %85 = vst.msk [vmem:[#allocation7 + $0x1e0] sm:$0xff] %vm74, %v68
    %86 = vst.msk [vmem:[#allocation7 + $0x1e8] sm:$0xff] %vm74, %v69
    %87 = vst.msk [vmem:[#allocation7 + $0x240] sm:$0xff] %vm74, %v70
    %88 = vst.msk [vmem:[#allocation7 + $0x248] sm:$0xff] %vm74, %v71
    %89 = vst.msk [vmem:[#allocation7 + $0x2a0] sm:$0xff] %vm74, %v72
    %90 = vst.msk [vmem:[#allocation7 + $0x2a8] sm:$0xff] %vm74, %v73
    %s91 = scalar_lea.vmem [#allocation2], 16
    %v92 = vld [vmem:[%s91] sm:$0xff]
    %v93 = vld [vmem:[%s91 + $0x8] sm:$0xff]
    %v94 = vmul.f32 %v40, %v92
    %v95 = vmul.f32 %v41, %v93
    %v96 = vmul.f32 %v42, %v92
    %v97 = vmul.f32 %v43, %v93
    %v98 = vmul.f32 %v44, %v92
    %v99 = vmul.f32 %v45, %v93
    %v100 = vmul.f32 %v46, %v92
    %v101 = vmul.f32 %v47, %v93
    %v102 = vmul.f32 %v48, %v92
    %v103 = vmul.f32 %v49, %v93
    %v104 = vmul.f32 %v50, %v92
    %v105 = vmul.f32 %v51, %v93
    %v106 = vmul.f32 %v52, %v92
    %v107 = vmul.f32 %v53, %v93
    %v108 = vmul.f32 %v54, %v92
    %v109 = vmul.f32 %v55, %v93
    %s110 = scalar_lea.vmem [#allocation7], 16
    %111 = vst.msk [vmem:[%s110] sm:$0xff] %vm74, %v94
    %112 = vst.msk [vmem:[%s110 + $0x8] sm:$0xff] %vm74, %v95
    %113 = vst.msk [vmem:[%s110 + $0x60] sm:$0xff] %vm74, %v96
    %114 = vst.msk [vmem:[%s110 + $0x68] sm:$0xff] %vm74, %v97
    %115 = vst.msk [vmem:[%s110 + $0xc0] sm:$0xff] %vm74, %v98
    %116 = vst.msk [vmem:[%s110 + $0xc8] sm:$0xff] %vm74, %v99
    %117 = vst.msk [vmem:[%s110 + $0x120] sm:$0xff] %vm74, %v100
    %118 = vst.msk [vmem:[%s110 + $0x128] sm:$0xff] %vm74, %v101
    %119 = vst.msk [vmem:[%s110 + $0x180] sm:$0xff] %vm74, %v102
    %120 = vst.msk [vmem:[%s110 + $0x188] sm:$0xff] %vm74, %v103
    %121 = vst.msk [vmem:[%s110 + $0x1e0] sm:$0xff] %vm74, %v104
    %122 = vst.msk [vmem:[%s110 + $0x1e8] sm:$0xff] %vm74, %v105
    %123 = vst.msk [vmem:[%s110 + $0x240] sm:$0xff] %vm74, %v106
    %124 = vst.msk [vmem:[%s110 + $0x248] sm:$0xff] %vm74, %v107
    %125 = vst.msk [vmem:[%s110 + $0x2a0] sm:$0xff] %vm74, %v108
    %126 = vst.msk [vmem:[%s110 + $0x2a8] sm:$0xff] %vm74, %v109
    %s127 = scalar_lea.vmem [#allocation2], 32
    %v128 = vld [vmem:[%s127] sm:$0xff]
    %v129 = vld [vmem:[%s127 + $0x8] sm:$0xff]
    %v130 = vmul.f32 %v40, %v128
    %v131 = vmul.f32 %v41, %v129
    %v132 = vmul.f32 %v42, %v128
    %v133 = vmul.f32 %v43, %v129
    %v134 = vmul.f32 %v44, %v128
    %v135 = vmul.f32 %v45, %v129
    %v136 = vmul.f32 %v46, %v128
    %v137 = vmul.f32 %v47, %v129
    %v138 = vmul.f32 %v48, %v128
    %v139 = vmul.f32 %v49, %v129
    %v140 = vmul.f32 %v50, %v128
    %v141 = vmul.f32 %v51, %v129
    %v142 = vmul.f32 %v52, %v128
    %v143 = vmul.f32 %v53, %v129
    %v144 = vmul.f32 %v54, %v128
    %v145 = vmul.f32 %v55, %v129
    %s146 = scalar_lea.vmem [#allocation7], 32
    %147 = vst.msk [vmem:[%s146] sm:$0xff] %vm74, %v130
    %148 = vst.msk [vmem:[%s146 + $0x8] sm:$0xff] %vm74, %v131
    %149 = vst.msk [vmem:[%s146 + $0x60] sm:$0xff] %vm74, %v132
    %150 = vst.msk [vmem:[%s146 + $0x68] sm:$0xff] %vm74, %v133
    %151 = vst.msk [vmem:[%s146 + $0xc0] sm:$0xff] %vm74, %v134
    %152 = vst.msk [vmem:[%s146 + $0xc8] sm:$0xff] %vm74, %v135
    %153 = vst.msk [vmem:[%s146 + $0x120] sm:$0xff] %vm74, %v136
    %154 = vst.msk [vmem:[%s146 + $0x128] sm:$0xff] %vm74, %v137
    %155 = vst.msk [vmem:[%s146 + $0x180] sm:$0xff] %vm74, %v138
    %156 = vst.msk [vmem:[%s146 + $0x188] sm:$0xff] %vm74, %v139
    %157 = vst.msk [vmem:[%s146 + $0x1e0] sm:$0xff] %vm74, %v140
    %158 = vst.msk [vmem:[%s146 + $0x1e8] sm:$0xff] %vm74, %v141
    %159 = vst.msk [vmem:[%s146 + $0x240] sm:$0xff] %vm74, %v142
    %160 = vst.msk [vmem:[%s146 + $0x248] sm:$0xff] %vm74, %v143
    %161 = vst.msk [vmem:[%s146 + $0x2a0] sm:$0xff] %vm74, %v144
    %162 = vst.msk [vmem:[%s146 + $0x2a8] sm:$0xff] %vm74, %v145
    %s163 = scalar_lea.vmem [#allocation2], 48
    %v164 = vld [vmem:[%s163] sm:$0xff]
    %v165 = vld [vmem:[%s163 + $0x8] sm:$0xff]
    %v166 = vmul.f32 %v40, %v164
    %v167 = vmul.f32 %v41, %v165
    %v168 = vmul.f32 %v42, %v164
    %v169 = vmul.f32 %v43, %v165
    %v170 = vmul.f32 %v44, %v164
    %v171 = vmul.f32 %v45, %v165
    %v172 = vmul.f32 %v46, %v164
    %v173 = vmul.f32 %v47, %v165
    %v174 = vmul.f32 %v48, %v164
    %v175 = vmul.f32 %v49, %v165
    %v176 = vmul.f32 %v50, %v164
    %v177 = vmul.f32 %v51, %v165
    %v178 = vmul.f32 %v52, %v164
    %v179 = vmul.f32 %v53, %v165
    %v180 = vmul.f32 %v54, %v164
    %v181 = vmul.f32 %v55, %v165
    %s182 = scalar_lea.vmem [#allocation7], 48
    %183 = vst.msk [vmem:[%s182] sm:$0xff] %vm74, %v166
    %184 = vst.msk [vmem:[%s182 + $0x8] sm:$0xff] %vm74, %v167
    %185 = vst.msk [vmem:[%s182 + $0x60] sm:$0xff] %vm74, %v168
    %186 = vst.msk [vmem:[%s182 + $0x68] sm:$0xff] %vm74, %v169
    %187 = vst.msk [vmem:[%s182 + $0xc0] sm:$0xff] %vm74, %v170
    %188 = vst.msk [vmem:[%s182 + $0xc8] sm:$0xff] %vm74, %v171
    %189 = vst.msk [vmem:[%s182 + $0x120] sm:$0xff] %vm74, %v172
    %190 = vst.msk [vmem:[%s182 + $0x128] sm:$0xff] %vm74, %v173
    %191 = vst.msk [vmem:[%s182 + $0x180] sm:$0xff] %vm74, %v174
    %192 = vst.msk [vmem:[%s182 + $0x188] sm:$0xff] %vm74, %v175
    %193 = vst.msk [vmem:[%s182 + $0x1e0] sm:$0xff] %vm74, %v176
    %194 = vst.msk [vmem:[%s182 + $0x1e8] sm:$0xff] %vm74, %v177
    %195 = vst.msk [vmem:[%s182 + $0x240] sm:$0xff] %vm74, %v178
    %196 = vst.msk [vmem:[%s182 + $0x248] sm:$0xff] %vm74, %v179
    %197 = vst.msk [vmem:[%s182 + $0x2a0] sm:$0xff] %vm74, %v180
    %198 = vst.msk [vmem:[%s182 + $0x2a8] sm:$0xff] %vm74, %v181
    %s199 = scalar_lea.vmem [#allocation2], 64
    %v200 = vld [vmem:[%s199] sm:$0xff]
    %v201 = vld [vmem:[%s199 + $0x8] sm:$0xff]
    %v202 = vmul.f32 %v40, %v200
    %v203 = vmul.f32 %v41, %v201
    %v204 = vmul.f32 %v42, %v200
    %v205 = vmul.f32 %v43, %v201
    %v206 = vmul.f32 %v44, %v200
    %v207 = vmul.f32 %v45, %v201
    %v208 = vmul.f32 %v46, %v200
    %v209 = vmul.f32 %v47, %v201
    %v210 = vmul.f32 %v48, %v200
    %v211 = vmul.f32 %v49, %v201
    %v212 = vmul.f32 %v50, %v200
    %v213 = vmul.f32 %v51, %v201
    %v214 = vmul.f32 %v52, %v200
    %v215 = vmul.f32 %v53, %v201
    %v216 = vmul.f32 %v54, %v200
    %v217 = vmul.f32 %v55, %v201
    %s218 = scalar_lea.vmem [#allocation7], 64
    %219 = vst.msk [vmem:[%s218] sm:$0xff] %vm74, %v202
    %220 = vst.msk [vmem:[%s218 + $0x8] sm:$0xff] %vm74, %v203
    %221 = vst.msk [vmem:[%s218 + $0x60] sm:$0xff] %vm74, %v204
    %222 = vst.msk [vmem:[%s218 + $0x68] sm:$0xff] %vm74, %v205
    %223 = vst.msk [vmem:[%s218 + $0xc0] sm:$0xff] %vm74, %v206
    %224 = vst.msk [vmem:[%s218 + $0xc8] sm:$0xff] %vm74, %v207
    %225 = vst.msk [vmem:[%s218 + $0x120] sm:$0xff] %vm74, %v208
    %226 = vst.msk [vmem:[%s218 + $0x128] sm:$0xff] %vm74, %v209
    %227 = vst.msk [vmem:[%s218 + $0x180] sm:$0xff] %vm74, %v210
    %228 = vst.msk [vmem:[%s218 + $0x188] sm:$0xff] %vm74, %v211
    %229 = vst.msk [vmem:[%s218 + $0x1e0] sm:$0xff] %vm74, %v212
    %230 = vst.msk [vmem:[%s218 + $0x1e8] sm:$0xff] %vm74, %v213
    %231 = vst.msk [vmem:[%s218 + $0x240] sm:$0xff] %vm74, %v214
    %232 = vst.msk [vmem:[%s218 + $0x248] sm:$0xff] %vm74, %v215
    %233 = vst.msk [vmem:[%s218 + $0x2a0] sm:$0xff] %vm74, %v216
    %234 = vst.msk [vmem:[%s218 + $0x2a8] sm:$0xff] %vm74, %v217
    %s235 = scalar_lea.vmem [#allocation2], 80
    %v236 = vld [vmem:[%s235] sm:$0xff]
    %v237 = vld [vmem:[%s235 + $0x8] sm:$0xff]
    %v238 = vmul.f32 %v40, %v236
    %v239 = vmul.f32 %v41, %v237
    %v240 = vmul.f32 %v42, %v236
    %v241 = vmul.f32 %v43, %v237
    %v242 = vmul.f32 %v44, %v236
    %v243 = vmul.f32 %v45, %v237
    %v244 = vmul.f32 %v46, %v236
    %v245 = vmul.f32 %v47, %v237
    %v246 = vmul.f32 %v48, %v236
    %v247 = vmul.f32 %v49, %v237
    %v248 = vmul.f32 %v50, %v236
    %v249 = vmul.f32 %v51, %v237
    %v250 = vmul.f32 %v52, %v236
    %v251 = vmul.f32 %v53, %v237
    %v252 = vmul.f32 %v54, %v236
    %v253 = vmul.f32 %v55, %v237
    %s254 = scalar_lea.vmem [#allocation7], 80
    %255 = vst.msk [vmem:[%s254] sm:$0xff] %vm74, %v238
    %256 = vst.msk [vmem:[%s254 + $0x8] sm:$0xff] %vm74, %v239
    %257 = vst.msk [vmem:[%s254 + $0x60] sm:$0xff] %vm74, %v240
    %258 = vst.msk [vmem:[%s254 + $0x68] sm:$0xff] %vm74, %v241
    %259 = vst.msk [vmem:[%s254 + $0xc0] sm:$0xff] %vm74, %v242
    %260 = vst.msk [vmem:[%s254 + $0xc8] sm:$0xff] %vm74, %v243
    %261 = vst.msk [vmem:[%s254 + $0x120] sm:$0xff] %vm74, %v244
    %262 = vst.msk [vmem:[%s254 + $0x128] sm:$0xff] %vm74, %v245
    %263 = vst.msk [vmem:[%s254 + $0x180] sm:$0xff] %vm74, %v246
    %264 = vst.msk [vmem:[%s254 + $0x188] sm:$0xff] %vm74, %v247
    %265 = vst.msk [vmem:[%s254 + $0x1e0] sm:$0xff] %vm74, %v248
    %266 = vst.msk [vmem:[%s254 + $0x1e8] sm:$0xff] %vm74, %v249
    %267 = vst.msk [vmem:[%s254 + $0x240] sm:$0xff] %vm74, %v250
    %268 = vst.msk [vmem:[%s254 + $0x248] sm:$0xff] %vm74, %v251
    %269 = vst.msk [vmem:[%s254 + $0x2a0] sm:$0xff] %vm74, %v252
    %270 = vst.msk [vmem:[%s254 + $0x2a8] sm:$0xff] %vm74, %v253
    // Predicated region
    $region18: #{tpu_custom_call.1} parent=1 // pred_check
      _
    $region19: #{tpu_custom_call.1} parent=1 // pred_check_branch
      %272 = sbr.rel (0) target = $region21
    $region20: #{tpu_custom_call.1} parent=1 // pred_region
      %s274 = ssub.s32 12288, 12288
      %275 = vsyncadd [#allocation4], %s274
      %s276 = sshll.u32 [#allocation7], 4
      %s277 = int_to_ptr.vmem [resolvable:$true] %s276
      %282 = dma.vmem_to_hbm [thread:$0]  %s277, 12288, %s2, [#allocation4], 128, 128, 8
    $region21: #{tpu_custom_call.1} parent=1 // pred_fallthru
      _
    // Predicated region
    $region22: #{tpu_custom_call.1} parent=1 // pred_check
      _
    $region23: #{tpu_custom_call.1} parent=1 // pred_check_branch
      %284 = sbr.rel (0) target = $region25
    $region24: #{tpu_custom_call.1} parent=1 // pred_region
      %285 = dma.done [#allocation4], 12288
    $region25: #{tpu_custom_call.1} parent=1 // pred_fallthru
      _
    %286 = vsyncpa [#allocation3], 1
    %287 = vsyncpa [#allocation6], 1
    %288 = vsyncpa [#allocation4], 1

</llo_original>
